<compile_context>
chip_gen: v5e
topology: v5e:2x2
jax: 0.10.0
libtpu: 0.0.40
codegen_flags: <defaults>
</compile_context>

<pallas_src>
import functools

import numpy as np
import jax
import jax.numpy as jnp
from jax import lax
from jax.experimental import pallas as pl
from jax.experimental.pallas import tpu as pltpu

MAX_LANE_TILE = 8192  # lane-axis tile (= voxels/8); 8 sublanes x 8192 lanes = 65536 voxels/step


# ----------------------------------------------------------------------------
# Fused Pallas kernel: 1x1x1 Conv3d projection (dense VPU FMAs) + boundary-masked
# KL(softmax(T/tau) || softmax(S/tau)) with online accumulation.
#
# Per grid step (b, split, k) the kernel sees sublane/lane-dense blocks:
#   x: (1, Cin,  8, TVd)  student features
#   t: (1, Cout, 8, TVd)  teacher logits
#   m: (1, 1,    8, TVd)  boundary mask ({0,1})
# w (Cin, Cout) and b (Cout,) live in SMEM and are read as scalars.
# ----------------------------------------------------------------------------
def _fused_bkd_kernel(w_ref, b_ref, x_ref, t_ref, m_ref, num_ref, acc_kd,
                      *, cin, cout, tau, tvd, s8, tiles_per_split, needs_mask):
    k = pl.program_id(2)

    @pl.when(k == 0)
    def _():
        acc_kd[...] = jnp.zeros_like(acc_kd)

    inv_tau = 1.0 / float(tau)

    # Per-channel (8, TVd) slabs — fully dense vregs (all 8 sublanes used).
    x_rows = [x_ref[0, c].astype(jnp.float32) for c in range(cin)]
    t_rows = []
    for c in range(cout):
        r = t_ref[0, c].astype(jnp.float32)
        if tau != 1.0:
            r = r * inv_tau
        t_rows.append(r)
    m = m_ref[0, 0].astype(jnp.float32)

    # --- student logits: 1x1x1 conv as unrolled VPU FMAs, w/b scalars in SMEM ---
    s_rows = []
    for c in range(cout):
        acc = x_rows[0] * w_ref[0, c]
        for i in range(1, cin):
            acc = acc + x_rows[i] * w_ref[i, c]
        acc = acc + b_ref[c]
        if tau != 1.0:
            acc = acc * inv_tau
        s_rows.append(acc)

    # --- student log-partition (online max over the Cout unrolled rows) -------
    smax = s_rows[0]
    for c in range(1, cout):
        smax = jnp.maximum(smax, s_rows[c])
    zs = jnp.exp(s_rows[0] - smax)
    for c in range(1, cout):
        zs = zs + jnp.exp(s_rows[c] - smax)
    log_zs = jnp.log(zs)

    # --- teacher softmax stats -------------------------------------------------
    tmax = t_rows[0]
    for c in range(1, cout):
        tmax = jnp.maximum(tmax, t_rows[c])
    et = [jnp.exp(t_rows[c] - tmax) for c in range(cout)]
    zt = et[0]
    for c in range(1, cout):
        zt = zt + et[c]
    log_zt = jnp.log(zt)

    # --- per-voxel KL(pT || pS), algebraically simplified ----------------------
    #   kd = (1/zt) * sum_c et_c*(t_c - s_c) + (smax - tmax) + (log_zs - log_zt)
    dot_ts = et[0] * (t_rows[0] - s_rows[0])
    for c in range(1, cout):
        dot_ts = dot_ts + et[c] * (t_rows[c] - s_rows[c])
    kd = dot_ts / zt + (smax - tmax) + (log_zs - log_zt)

    contrib = kd * m
    if needs_mask:
        # Tail tile (or clamped over-coverage tile): zero out-of-range lanes.
        tile_idx = pl.program_id(1) * tiles_per_split + k
        lane = lax.broadcasted_iota(jnp.int32, (8, tvd), 1)
        contrib = jnp.where(tile_idx * tvd + lane < s8, contrib, 0.0)

    acc_kd[...] += contrib

    @pl.when(k == pl.num_programs(2) - 1)
    def _():
        num = jnp.sum(acc_kd[...])
        num_ref[...] = jnp.broadcast_to(num, num_ref.shape).astype(jnp.float32)


def fused_boundary_kd(x, t, m, w, b, tau):
    """x: (N, Cin, 8, S8), t: (N, Cout, 8, S8), m: (N, 1, 8, S8) -> per-(batch, split) num partials."""
    n, cin, _, s8 = x.shape
    cout = t.shape[1]

    if s8 <= MAX_LANE_TILE:
        tvd, n_lane_tiles = s8, 1              # single full-width tile (== full array dim)
    else:
        tvd = MAX_LANE_TILE                    # multiple of 128
        n_lane_tiles = pl.cdiv(s8, tvd)

    # Second parallel axis so v7x's two TensorCores both get work even with N=1.
    nsplit = 2 if n_lane_tiles >= 2 else 1
    tiles_per_split = pl.cdiv(n_lane_tiles, nsplit)
    needs_mask = (nsplit * tiles_per_split * tvd) != s8

    def lane_block(sp, k):
        # Clamp so over-coverage tiles never DMA out of bounds; their contribution
        # is zeroed in-kernel by the iota mask.
        return jnp.minimum(sp * tiles_per_split + k, n_lane_tiles - 1)

    kernel = functools.partial(
        _fused_bkd_kernel, cin=cin, cout=cout, tau=float(tau), tvd=tvd, s8=s8,
        tiles_per_split=tiles_per_split, needs_mask=needs_mask)

    num = pl.pallas_call(
        kernel,
        out_shape=jax.ShapeDtypeStruct((n, nsplit, 8, 128), jnp.float32),
        grid=(n, nsplit, tiles_per_split),
        in_specs=[
            pl.BlockSpec(memory_space=pltpu.MemorySpace.SMEM),   # w (Cin, Cout)
            pl.BlockSpec(memory_space=pltpu.MemorySpace.SMEM),   # b (Cout,)
            pl.BlockSpec((1, cin, 8, tvd),
                         lambda bi, sp, k: (bi, 0, 0, lane_block(sp, k))),
            pl.BlockSpec((1, cout, 8, tvd),
                         lambda bi, sp, k: (bi, 0, 0, lane_block(sp, k))),
            pl.BlockSpec((1, 1, 8, tvd),
                         lambda bi, sp, k: (bi, 0, 0, lane_block(sp, k))),
        ],
        out_specs=pl.BlockSpec((1, 1, 8, 128), lambda bi, sp, k: (bi, sp, 0, 0)),
        scratch_shapes=[pltpu.VMEM((8, tvd), jnp.float32)],   # masked-KL accumulator
        compiler_params=pltpu.CompilerParams(
            dimension_semantics=("parallel", "parallel", "arbitrary"),
            vmem_limit_bytes=32 * 1024 * 1024,
        ),
    )(w, b, x, t, m)
    return num


# ----------------------------------------------------------------------------
# Glue: boundary extraction from integer labels (cheap min/max form; equivalent
# to the one-hot dilation union when background is included).
# ----------------------------------------------------------------------------
def compute_boundary(label, num_classes, kernel_size, include_background):
    pad = kernel_size // 2
    if include_background:
        # TODO(synk): min/max shortcut assumes no ignore/void label values (e.g. 255).
        lab = label.astype(jnp.float32)
        dims = (1, kernel_size, kernel_size, kernel_size)
        pads = ((0, 0), (pad, pad), (pad, pad), (pad, pad))
        mx = lax.reduce_window(lab, -jnp.inf, lax.max, dims, (1, 1, 1, 1), pads)
        mn = lax.reduce_window(lab, jnp.inf, lax.min, dims, (1, 1, 1, 1), pads)
        return jnp.logical_or(mx != lab, mn != lab).astype(jnp.float32)
    # foreground-only boundary needs the per-class path
    onehot = jax.nn.one_hot(label, num_classes, dtype=jnp.float32)  # (N,D,H,W,C)
    dil = lax.reduce_window(
        onehot, -jnp.inf, lax.max,
        (1, kernel_size, kernel_size, kernel_size, 1), (1,) * 5,
        ((0, 0), (pad, pad), (pad, pad), (pad, pad), (0, 0)))
    return jnp.max((dil - onehot)[..., 1:], axis=-1)


# ----------------------------------------------------------------------------
# DKDLoss8.forward
# ----------------------------------------------------------------------------
def dkd_loss8_forward(feat_student, logits_teacher, label, w, b, *, tau=1.0,
                      kernel_size=3, bd_include_background=True,
                      loss_weight=1.0, overall_loss_weight=1.0):
    n, cin, d, h, ww = feat_student.shape
    cout = w.shape[1]
    s = d * h * ww

    # NCDHW -> channels-first flattened voxels: pure reshapes, no transpose copies.
    x = feat_student.reshape(n, cin, s)
    t = logits_teacher.reshape(n, cout, s)
    mask = compute_boundary(label, cout, kernel_size, bd_include_background)
    den = jnp.sum(mask)                      # boundary-voxel count, fused into the XLA glue
    m = mask.reshape(n, 1, s)

    # Sublane-dense layout: (N, C, S) -> (N, C, 8, S/8); free row-major reshape.
    if s % 8 != 0:
        # TODO(synk): rare case (D*H*W not divisible by 8); costs one extra copy.
        pad = (-s) % 8
        padw = ((0, 0), (0, 0), (0, pad))
        x, t, m = jnp.pad(x, padw), jnp.pad(t, padw), jnp.pad(m, padw)
        s = s + pad
    s8 = s // 8
    x = x.reshape(n, cin, 8, s8)
    t = t.reshape(n, cout, 8, s8)
    m = m.reshape(n, 1, 8, s8)

    num_p = fused_boundary_kd(x, t, m, w, b, tau)
    num = jnp.sum(num_p[:, :, 0, 0])
    loss = num / (den + 1e-6) * (tau * tau)   # single epsilon, applied once
    return dict(bkd_loss=overall_loss_weight * loss_weight * loss)


# ----------------------------------------------------------------------------
# Pure-JAX reference (independent path: one-hot boundary + plain softmax/KL)
# ----------------------------------------------------------------------------
def _compute_boundary_onehot(label, num_classes, kernel_size, include_background):
    onehot = jax.nn.one_hot(label, num_classes, dtype=jnp.float32)
    pad = kernel_size // 2
    dil = lax.reduce_window(
        onehot, -jnp.inf, lax.max,
        (1, kernel_size, kernel_size, kernel_size, 1), (1,) * 5,
        ((0, 0), (pad, pad), (pad, pad), (pad, pad), (0, 0)))
    bc = dil - onehot
    if not include_background:
        bc = bc[..., 1:]
    return jnp.max(bc, axis=-1)


def dkd_loss8_reference(feat_student, logits_teacher, label, w, b, *, tau=1.0,
                        kernel_size=3, bd_include_background=True):
    n, cin, d, h, ww = feat_student.shape
    cout = w.shape[1]
    x = jnp.transpose(feat_student, (0, 2, 3, 4, 1)).reshape(-1, cin)
    t = jnp.transpose(logits_teacher, (0, 2, 3, 4, 1)).reshape(-1, cout)
    m = _compute_boundary_onehot(label, cout, kernel_size,
                                 bd_include_background).reshape(-1, 1)
    s = x @ w + b[None, :]
    log_ps = jax.nn.log_softmax(s / tau, axis=-1)
    log_pt = jax.nn.log_softmax(t / tau, axis=-1)
    pt = jnp.exp(log_pt)
    kd = jnp.sum(pt * (log_pt - log_ps), axis=-1, keepdims=True)
    return jnp.sum(kd * m) / (jnp.sum(m) + 1e-6) * (tau * tau)


if __name__ == "__main__":
    key = jax.random.PRNGKey(0)
    k1, k2, k3, k4, k5 = jax.random.split(key, 5)

    N, Cin, D, H, W = 2, 8, 8, 8, 8
    num_classes = 4

    feat_student = jax.random.normal(k1, (N, Cin, D, H, W), jnp.float32)
    logits_teacher = jax.random.normal(k2, (N, num_classes, D, H, W), jnp.float32)
    label = jax.random.randint(k3, (N, D, H, W), 0, num_classes, dtype=jnp.int32)

    # Projector params: nn.Conv3d(Cin, num_classes, 1) with
    # kaiming_normal_(mode='fan_out', nonlinearity='relu'); fan_out = num_classes.
    fan_out = num_classes
    w = jax.random.normal(k4, (Cin, num_classes), jnp.float32) * jnp.sqrt(2.0 / fan_out)
    bound = 1.0 / np.sqrt(Cin)  # PyTorch default conv bias init
    b = jax.random.uniform(k5, (num_classes,), jnp.float32, -bound, bound)

    fwd = jax.jit(dkd_loss8_forward)
    out = fwd(feat_student, logits_teacher, label, w, b)
    loss = jax.block_until_ready(out["bkd_loss"])

    ref = dkd_loss8_reference(feat_student, logits_teacher, label, w, b)
    # exact divide in-kernel (approx reciprocal removed) -> tighter tolerance
    np.testing.assert_allclose(np.asarray(loss), np.asarray(ref), rtol=5e-4, atol=1e-5)

    print("KERNEL_OK")
</pallas_src>

<mosaic_0001>
module attributes {stable_mosaic.version = 11 : i64} {
  func.func @_fused_bkd_kernel(%arg0: i32, %arg1: i32, %arg2: i32, %arg3: memref<8x4xf32, #tpu.memory_space<smem>>, %arg4: memref<4xf32, #tpu.memory_space<smem>>, %arg5: memref<1x8x8x64xf32, #tpu.memory_space<vmem>>, %arg6: memref<1x4x8x64xf32, #tpu.memory_space<vmem>>, %arg7: memref<1x1x8x64xf32, #tpu.memory_space<vmem>>, %arg8: memref<1x1x8x128xf32, #tpu.memory_space<vmem>>, %arg9: memref<8x64xf32, #tpu.memory_space<vmem>>) attributes {dimension_semantics = [#tpu.dimension_semantics<parallel>, #tpu.dimension_semantics<parallel>, #tpu.dimension_semantics<arbitrary>], iteration_bounds = array<i64: 2, 1, 1>, scalar_prefetch = 0 : i64, scratch_operands = 1 : i64, tpu.core_type = #tpu.core_type<tc>, window_params = [{transform_indices = @transform_0, window_bounds = array<i64: 8, 4>}, {transform_indices = @transform_1, window_bounds = array<i64: 4>}, {transform_indices = @transform_2, window_bounds = array<i64: 1, 8, 8, 64>}, {transform_indices = @transform_3, window_bounds = array<i64: 1, 4, 8, 64>}, {transform_indices = @transform_4, window_bounds = array<i64: 1, 1, 8, 64>}, {transform_indices = @transform_5, window_bounds = array<i64: 1, 1, 8, 128>}]} {
    %c0_i32 = arith.constant 0 : i32
    %0 = arith.cmpi eq, %arg2, %c0_i32 : i32
    %1 = arith.extui %0 : i1 to i32
    %c0_i32_0 = arith.constant 0 : i32
    %2 = arith.cmpi ne, %1, %c0_i32_0 : i32
    scf.if %2 {
      %cst = arith.constant 0.000000e+00 : f32
      %218 = vector.broadcast %cst : f32 to vector<8x64xf32>
      %c0_119 = arith.constant 0 : index
      %c0_120 = arith.constant 0 : index
      %219 = vector.load %arg9[%c0_119, %c0_120] : memref<8x64xf32, #tpu.memory_space<vmem>>, vector<8x64xf32>
      tpu.vector_store %arg9[%c0_119, %c0_120], %218 {strides = array<i32>} : memref<8x64xf32, #tpu.memory_space<vmem>>, vector<8x64xf32>,
    } else {
    }
    %c0 = arith.constant 0 : index
    %c0_1 = arith.constant 0 : index
    %c0_2 = arith.constant 0 : index
    %c0_3 = arith.constant 0 : index
    %3 = vector.load %arg5[%c0, %c0_1, %c0_2, %c0_3] : memref<1x8x8x64xf32, #tpu.memory_space<vmem>>, vector<1x1x8x64xf32>
    %4 = vector.shape_cast %3 : vector<1x1x8x64xf32> to vector<8x64xf32>
    %c0_4 = arith.constant 0 : index
    %c1 = arith.constant 1 : index
    %c0_5 = arith.constant 0 : index
    %c0_6 = arith.constant 0 : index
    %5 = vector.load %arg5[%c0_4, %c1, %c0_5, %c0_6] : memref<1x8x8x64xf32, #tpu.memory_space<vmem>>, vector<1x1x8x64xf32>
    %6 = vector.shape_cast %5 : vector<1x1x8x64xf32> to vector<8x64xf32>
    %c0_7 = arith.constant 0 : index
    %c2 = arith.constant 2 : index
    %c0_8 = arith.constant 0 : index
    %c0_9 = arith.constant 0 : index
    %7 = vector.load %arg5[%c0_7, %c2, %c0_8, %c0_9] : memref<1x8x8x64xf32, #tpu.memory_space<vmem>>, vector<1x1x8x64xf32>
    %8 = vector.shape_cast %7 : vector<1x1x8x64xf32> to vector<8x64xf32>
    %c0_10 = arith.constant 0 : index
    %c3 = arith.constant 3 : index
    %c0_11 = arith.constant 0 : index
    %c0_12 = arith.constant 0 : index
    %9 = vector.load %arg5[%c0_10, %c3, %c0_11, %c0_12] : memref<1x8x8x64xf32, #tpu.memory_space<vmem>>, vector<1x1x8x64xf32>
    %10 = vector.shape_cast %9 : vector<1x1x8x64xf32> to vector<8x64xf32>
    %c0_13 = arith.constant 0 : index
    %c4 = arith.constant 4 : index
    %c0_14 = arith.constant 0 : index
    %c0_15 = arith.constant 0 : index
    %11 = vector.load %arg5[%c0_13, %c4, %c0_14, %c0_15] : memref<1x8x8x64xf32, #tpu.memory_space<vmem>>, vector<1x1x8x64xf32>
    %12 = vector.shape_cast %11 : vector<1x1x8x64xf32> to vector<8x64xf32>
    %c0_16 = arith.constant 0 : index
    %c5 = arith.constant 5 : index
    %c0_17 = arith.constant 0 : index
    %c0_18 = arith.constant 0 : index
    %13 = vector.load %arg5[%c0_16, %c5, %c0_17, %c0_18] : memref<1x8x8x64xf32, #tpu.memory_space<vmem>>, vector<1x1x8x64xf32>
    %14 = vector.shape_cast %13 : vector<1x1x8x64xf32> to vector<8x64xf32>
    %c0_19 = arith.constant 0 : index
    %c6 = arith.constant 6 : index
    %c0_20 = arith.constant 0 : index
    %c0_21 = arith.constant 0 : index
    %15 = vector.load %arg5[%c0_19, %c6, %c0_20, %c0_21] : memref<1x8x8x64xf32, #tpu.memory_space<vmem>>, vector<1x1x8x64xf32>
    %16 = vector.shape_cast %15 : vector<1x1x8x64xf32> to vector<8x64xf32>
    %c0_22 = arith.constant 0 : index
    %c7 = arith.constant 7 : index
    %c0_23 = arith.constant 0 : index
    %c0_24 = arith.constant 0 : index
    %17 = vector.load %arg5[%c0_22, %c7, %c0_23, %c0_24] : memref<1x8x8x64xf32, #tpu.memory_space<vmem>>, vector<1x1x8x64xf32>
    %18 = vector.shape_cast %17 : vector<1x1x8x64xf32> to vector<8x64xf32>
    %c0_25 = arith.constant 0 : index
    %c0_26 = arith.constant 0 : index
    %c0_27 = arith.constant 0 : index
    %c0_28 = arith.constant 0 : index
    %19 = vector.load %arg6[%c0_25, %c0_26, %c0_27, %c0_28] : memref<1x4x8x64xf32, #tpu.memory_space<vmem>>, vector<1x1x8x64xf32>
    %20 = vector.shape_cast %19 : vector<1x1x8x64xf32> to vector<8x64xf32>
    %c0_29 = arith.constant 0 : index
    %c1_30 = arith.constant 1 : index
    %c0_31 = arith.constant 0 : index
    %c0_32 = arith.constant 0 : index
    %21 = vector.load %arg6[%c0_29, %c1_30, %c0_31, %c0_32] : memref<1x4x8x64xf32, #tpu.memory_space<vmem>>, vector<1x1x8x64xf32>
    %22 = vector.shape_cast %21 : vector<1x1x8x64xf32> to vector<8x64xf32>
    %c0_33 = arith.constant 0 : index
    %c2_34 = arith.constant 2 : index
    %c0_35 = arith.constant 0 : index
    %c0_36 = arith.constant 0 : index
    %23 = vector.load %arg6[%c0_33, %c2_34, %c0_35, %c0_36] : memref<1x4x8x64xf32, #tpu.memory_space<vmem>>, vector<1x1x8x64xf32>
    %24 = vector.shape_cast %23 : vector<1x1x8x64xf32> to vector<8x64xf32>
    %c0_37 = arith.constant 0 : index
    %c3_38 = arith.constant 3 : index
    %c0_39 = arith.constant 0 : index
    %c0_40 = arith.constant 0 : index
    %25 = vector.load %arg6[%c0_37, %c3_38, %c0_39, %c0_40] : memref<1x4x8x64xf32, #tpu.memory_space<vmem>>, vector<1x1x8x64xf32>
    %26 = vector.shape_cast %25 : vector<1x1x8x64xf32> to vector<8x64xf32>
    %c0_41 = arith.constant 0 : index
    %c0_42 = arith.constant 0 : index
    %c0_43 = arith.constant 0 : index
    %c0_44 = arith.constant 0 : index
    %27 = vector.load %arg7[%c0_41, %c0_42, %c0_43, %c0_44] : memref<1x1x8x64xf32, #tpu.memory_space<vmem>>, vector<1x1x8x64xf32>
    %28 = vector.shape_cast %27 : vector<1x1x8x64xf32> to vector<8x64xf32>
    %c0_45 = arith.constant 0 : index
    %c0_46 = arith.constant 0 : index
    %29 = memref.load %arg3[%c0_45, %c0_46] : memref<8x4xf32, #tpu.memory_space<smem>>
    %30 = vector.broadcast %29 : f32 to vector<8x64xf32>
    %31 = arith.mulf %4, %30 : vector<8x64xf32>
    %c1_47 = arith.constant 1 : index
    %c0_48 = arith.constant 0 : index
    %32 = memref.load %arg3[%c1_47, %c0_48] : memref<8x4xf32, #tpu.memory_space<smem>>
    %33 = vector.broadcast %32 : f32 to vector<8x64xf32>
    %34 = arith.mulf %6, %33 : vector<8x64xf32>
    %35 = arith.addf %31, %34 : vector<8x64xf32>
    %c2_49 = arith.constant 2 : index
    %c0_50 = arith.constant 0 : index
    %36 = memref.load %arg3[%c2_49, %c0_50] : memref<8x4xf32, #tpu.memory_space<smem>>
    %37 = vector.broadcast %36 : f32 to vector<8x64xf32>
    %38 = arith.mulf %8, %37 : vector<8x64xf32>
    %39 = arith.addf %35, %38 : vector<8x64xf32>
    %c3_51 = arith.constant 3 : index
    %c0_52 = arith.constant 0 : index
    %40 = memref.load %arg3[%c3_51, %c0_52] : memref<8x4xf32, #tpu.memory_space<smem>>
    %41 = vector.broadcast %40 : f32 to vector<8x64xf32>
    %42 = arith.mulf %10, %41 : vector<8x64xf32>
    %43 = arith.addf %39, %42 : vector<8x64xf32>
    %c4_53 = arith.constant 4 : index
    %c0_54 = arith.constant 0 : index
    %44 = memref.load %arg3[%c4_53, %c0_54] : memref<8x4xf32, #tpu.memory_space<smem>>
    %45 = vector.broadcast %44 : f32 to vector<8x64xf32>
    %46 = arith.mulf %12, %45 : vector<8x64xf32>
    %47 = arith.addf %43, %46 : vector<8x64xf32>
    %c5_55 = arith.constant 5 : index
    %c0_56 = arith.constant 0 : index
    %48 = memref.load %arg3[%c5_55, %c0_56] : memref<8x4xf32, #tpu.memory_space<smem>>
    %49 = vector.broadcast %48 : f32 to vector<8x64xf32>
    %50 = arith.mulf %14, %49 : vector<8x64xf32>
    %51 = arith.addf %47, %50 : vector<8x64xf32>
    %c6_57 = arith.constant 6 : index
    %c0_58 = arith.constant 0 : index
    %52 = memref.load %arg3[%c6_57, %c0_58] : memref<8x4xf32, #tpu.memory_space<smem>>
    %53 = vector.broadcast %52 : f32 to vector<8x64xf32>
    %54 = arith.mulf %16, %53 : vector<8x64xf32>
    %55 = arith.addf %51, %54 : vector<8x64xf32>
    %c7_59 = arith.constant 7 : index
    %c0_60 = arith.constant 0 : index
    %56 = memref.load %arg3[%c7_59, %c0_60] : memref<8x4xf32, #tpu.memory_space<smem>>
    %57 = vector.broadcast %56 : f32 to vector<8x64xf32>
    %58 = arith.mulf %18, %57 : vector<8x64xf32>
    %59 = arith.addf %55, %58 : vector<8x64xf32>
    %c0_61 = arith.constant 0 : index
    %60 = memref.load %arg4[%c0_61] : memref<4xf32, #tpu.memory_space<smem>>
    %61 = vector.broadcast %60 : f32 to vector<8x64xf32>
    %62 = arith.addf %59, %61 : vector<8x64xf32>
    %c0_62 = arith.constant 0 : index
    %c1_63 = arith.constant 1 : index
    %63 = memref.load %arg3[%c0_62, %c1_63] : memref<8x4xf32, #tpu.memory_space<smem>>
    %64 = vector.broadcast %63 : f32 to vector<8x64xf32>
    %65 = arith.mulf %4, %64 : vector<8x64xf32>
    %c1_64 = arith.constant 1 : index
    %c1_65 = arith.constant 1 : index
    %66 = memref.load %arg3[%c1_64, %c1_65] : memref<8x4xf32, #tpu.memory_space<smem>>
    %67 = vector.broadcast %66 : f32 to vector<8x64xf32>
    %68 = arith.mulf %6, %67 : vector<8x64xf32>
    %69 = arith.addf %65, %68 : vector<8x64xf32>
    %c2_66 = arith.constant 2 : index
    %c1_67 = arith.constant 1 : index
    %70 = memref.load %arg3[%c2_66, %c1_67] : memref<8x4xf32, #tpu.memory_space<smem>>
    %71 = vector.broadcast %70 : f32 to vector<8x64xf32>
    %72 = arith.mulf %8, %71 : vector<8x64xf32>
    %73 = arith.addf %69, %72 : vector<8x64xf32>
    %c3_68 = arith.constant 3 : index
    %c1_69 = arith.constant 1 : index
    %74 = memref.load %arg3[%c3_68, %c1_69] : memref<8x4xf32, #tpu.memory_space<smem>>
    %75 = vector.broadcast %74 : f32 to vector<8x64xf32>
    %76 = arith.mulf %10, %75 : vector<8x64xf32>
    %77 = arith.addf %73, %76 : vector<8x64xf32>
    %c4_70 = arith.constant 4 : index
    %c1_71 = arith.constant 1 : index
    %78 = memref.load %arg3[%c4_70, %c1_71] : memref<8x4xf32, #tpu.memory_space<smem>>
    %79 = vector.broadcast %78 : f32 to vector<8x64xf32>
    %80 = arith.mulf %12, %79 : vector<8x64xf32>
    %81 = arith.addf %77, %80 : vector<8x64xf32>
    %c5_72 = arith.constant 5 : index
    %c1_73 = arith.constant 1 : index
    %82 = memref.load %arg3[%c5_72, %c1_73] : memref<8x4xf32, #tpu.memory_space<smem>>
    %83 = vector.broadcast %82 : f32 to vector<8x64xf32>
    %84 = arith.mulf %14, %83 : vector<8x64xf32>
    %85 = arith.addf %81, %84 : vector<8x64xf32>
    %c6_74 = arith.constant 6 : index
    %c1_75 = arith.constant 1 : index
    %86 = memref.load %arg3[%c6_74, %c1_75] : memref<8x4xf32, #tpu.memory_space<smem>>
    %87 = vector.broadcast %86 : f32 to vector<8x64xf32>
    %88 = arith.mulf %16, %87 : vector<8x64xf32>
    %89 = arith.addf %85, %88 : vector<8x64xf32>
    %c7_76 = arith.constant 7 : index
    %c1_77 = arith.constant 1 : index
    %90 = memref.load %arg3[%c7_76, %c1_77] : memref<8x4xf32, #tpu.memory_space<smem>>
    %91 = vector.broadcast %90 : f32 to vector<8x64xf32>
    %92 = arith.mulf %18, %91 : vector<8x64xf32>
    %93 = arith.addf %89, %92 : vector<8x64xf32>
    %c1_78 = arith.constant 1 : index
    %94 = memref.load %arg4[%c1_78] : memref<4xf32, #tpu.memory_space<smem>>
    %95 = vector.broadcast %94 : f32 to vector<8x64xf32>
    %96 = arith.addf %93, %95 : vector<8x64xf32>
    %c0_79 = arith.constant 0 : index
    %c2_80 = arith.constant 2 : index
    %97 = memref.load %arg3[%c0_79, %c2_80] : memref<8x4xf32, #tpu.memory_space<smem>>
    %98 = vector.broadcast %97 : f32 to vector<8x64xf32>
    %99 = arith.mulf %4, %98 : vector<8x64xf32>
    %c1_81 = arith.constant 1 : index
    %c2_82 = arith.constant 2 : index
    %100 = memref.load %arg3[%c1_81, %c2_82] : memref<8x4xf32, #tpu.memory_space<smem>>
    %101 = vector.broadcast %100 : f32 to vector<8x64xf32>
    %102 = arith.mulf %6, %101 : vector<8x64xf32>
    %103 = arith.addf %99, %102 : vector<8x64xf32>
    %c2_83 = arith.constant 2 : index
    %c2_84 = arith.constant 2 : index
    %104 = memref.load %arg3[%c2_83, %c2_84] : memref<8x4xf32, #tpu.memory_space<smem>>
    %105 = vector.broadcast %104 : f32 to vector<8x64xf32>
    %106 = arith.mulf %8, %105 : vector<8x64xf32>
    %107 = arith.addf %103, %106 : vector<8x64xf32>
    %c3_85 = arith.constant 3 : index
    %c2_86 = arith.constant 2 : index
    %108 = memref.load %arg3[%c3_85, %c2_86] : memref<8x4xf32, #tpu.memory_space<smem>>
    %109 = vector.broadcast %108 : f32 to vector<8x64xf32>
    %110 = arith.mulf %10, %109 : vector<8x64xf32>
    %111 = arith.addf %107, %110 : vector<8x64xf32>
    %c4_87 = arith.constant 4 : index
    %c2_88 = arith.constant 2 : index
    %112 = memref.load %arg3[%c4_87, %c2_88] : memref<8x4xf32, #tpu.memory_space<smem>>
    %113 = vector.broadcast %112 : f32 to vector<8x64xf32>
    %114 = arith.mulf %12, %113 : vector<8x64xf32>
    %115 = arith.addf %111, %114 : vector<8x64xf32>
    %c5_89 = arith.constant 5 : index
    %c2_90 = arith.constant 2 : index
    %116 = memref.load %arg3[%c5_89, %c2_90] : memref<8x4xf32, #tpu.memory_space<smem>>
    %117 = vector.broadcast %116 : f32 to vector<8x64xf32>
    %118 = arith.mulf %14, %117 : vector<8x64xf32>
    %119 = arith.addf %115, %118 : vector<8x64xf32>
    %c6_91 = arith.constant 6 : index
    %c2_92 = arith.constant 2 : index
    %120 = memref.load %arg3[%c6_91, %c2_92] : memref<8x4xf32, #tpu.memory_space<smem>>
    %121 = vector.broadcast %120 : f32 to vector<8x64xf32>
    %122 = arith.mulf %16, %121 : vector<8x64xf32>
    %123 = arith.addf %119, %122 : vector<8x64xf32>
    %c7_93 = arith.constant 7 : index
    %c2_94 = arith.constant 2 : index
    %124 = memref.load %arg3[%c7_93, %c2_94] : memref<8x4xf32, #tpu.memory_space<smem>>
    %125 = vector.broadcast %124 : f32 to vector<8x64xf32>
    %126 = arith.mulf %18, %125 : vector<8x64xf32>
    %127 = arith.addf %123, %126 : vector<8x64xf32>
    %c2_95 = arith.constant 2 : index
    %128 = memref.load %arg4[%c2_95] : memref<4xf32, #tpu.memory_space<smem>>
    %129 = vector.broadcast %128 : f32 to vector<8x64xf32>
    %130 = arith.addf %127, %129 : vector<8x64xf32>
    %c0_96 = arith.constant 0 : index
    %c3_97 = arith.constant 3 : index
    %131 = memref.load %arg3[%c0_96, %c3_97] : memref<8x4xf32, #tpu.memory_space<smem>>
    %132 = vector.broadcast %131 : f32 to vector<8x64xf32>
    %133 = arith.mulf %4, %132 : vector<8x64xf32>
    %c1_98 = arith.constant 1 : index
    %c3_99 = arith.constant 3 : index
    %134 = memref.load %arg3[%c1_98, %c3_99] : memref<8x4xf32, #tpu.memory_space<smem>>
    %135 = vector.broadcast %134 : f32 to vector<8x64xf32>
    %136 = arith.mulf %6, %135 : vector<8x64xf32>
    %137 = arith.addf %133, %136 : vector<8x64xf32>
    %c2_100 = arith.constant 2 : index
    %c3_101 = arith.constant 3 : index
    %138 = memref.load %arg3[%c2_100, %c3_101] : memref<8x4xf32, #tpu.memory_space<smem>>
    %139 = vector.broadcast %138 : f32 to vector<8x64xf32>
    %140 = arith.mulf %8, %139 : vector<8x64xf32>
    %141 = arith.addf %137, %140 : vector<8x64xf32>
    %c3_102 = arith.constant 3 : index
    %c3_103 = arith.constant 3 : index
    %142 = memref.load %arg3[%c3_102, %c3_103] : memref<8x4xf32, #tpu.memory_space<smem>>
    %143 = vector.broadcast %142 : f32 to vector<8x64xf32>
    %144 = arith.mulf %10, %143 : vector<8x64xf32>
    %145 = arith.addf %141, %144 : vector<8x64xf32>
    %c4_104 = arith.constant 4 : index
    %c3_105 = arith.constant 3 : index
    %146 = memref.load %arg3[%c4_104, %c3_105] : memref<8x4xf32, #tpu.memory_space<smem>>
    %147 = vector.broadcast %146 : f32 to vector<8x64xf32>
    %148 = arith.mulf %12, %147 : vector<8x64xf32>
    %149 = arith.addf %145, %148 : vector<8x64xf32>
    %c5_106 = arith.constant 5 : index
    %c3_107 = arith.constant 3 : index
    %150 = memref.load %arg3[%c5_106, %c3_107] : memref<8x4xf32, #tpu.memory_space<smem>>
    %151 = vector.broadcast %150 : f32 to vector<8x64xf32>
    %152 = arith.mulf %14, %151 : vector<8x64xf32>
    %153 = arith.addf %149, %152 : vector<8x64xf32>
    %c6_108 = arith.constant 6 : index
    %c3_109 = arith.constant 3 : index
    %154 = memref.load %arg3[%c6_108, %c3_109] : memref<8x4xf32, #tpu.memory_space<smem>>
    %155 = vector.broadcast %154 : f32 to vector<8x64xf32>
    %156 = arith.mulf %16, %155 : vector<8x64xf32>
    %157 = arith.addf %153, %156 : vector<8x64xf32>
    %c7_110 = arith.constant 7 : index
    %c3_111 = arith.constant 3 : index
    %158 = memref.load %arg3[%c7_110, %c3_111] : memref<8x4xf32, #tpu.memory_space<smem>>
    %159 = vector.broadcast %158 : f32 to vector<8x64xf32>
    %160 = arith.mulf %18, %159 : vector<8x64xf32>
    %161 = arith.addf %157, %160 : vector<8x64xf32>
    %c3_112 = arith.constant 3 : index
    %162 = memref.load %arg4[%c3_112] : memref<4xf32, #tpu.memory_space<smem>>
    %163 = vector.broadcast %162 : f32 to vector<8x64xf32>
    %164 = arith.addf %161, %163 : vector<8x64xf32>
    %165 = arith.maximumf %62, %96 : vector<8x64xf32>
    %166 = arith.maximumf %165, %130 : vector<8x64xf32>
    %167 = arith.maximumf %166, %164 : vector<8x64xf32>
    %168 = arith.subf %62, %167 : vector<8x64xf32>
    %169 = math.exp %168 : vector<8x64xf32>
    %170 = arith.subf %96, %167 : vector<8x64xf32>
    %171 = math.exp %170 : vector<8x64xf32>
    %172 = arith.addf %169, %171 : vector<8x64xf32>
    %173 = arith.subf %130, %167 : vector<8x64xf32>
    %174 = math.exp %173 : vector<8x64xf32>
    %175 = arith.addf %172, %174 : vector<8x64xf32>
    %176 = arith.subf %164, %167 : vector<8x64xf32>
    %177 = math.exp %176 : vector<8x64xf32>
    %178 = arith.addf %175, %177 : vector<8x64xf32>
    %179 = math.log %178 : vector<8x64xf32>
    %180 = arith.maximumf %20, %22 : vector<8x64xf32>
    %181 = arith.maximumf %180, %24 : vector<8x64xf32>
    %182 = arith.maximumf %181, %26 : vector<8x64xf32>
    %183 = arith.subf %20, %182 : vector<8x64xf32>
    %184 = math.exp %183 : vector<8x64xf32>
    %185 = arith.subf %22, %182 : vector<8x64xf32>
    %186 = math.exp %185 : vector<8x64xf32>
    %187 = arith.subf %24, %182 : vector<8x64xf32>
    %188 = math.exp %187 : vector<8x64xf32>
    %189 = arith.subf %26, %182 : vector<8x64xf32>
    %190 = math.exp %189 : vector<8x64xf32>
    %191 = arith.addf %184, %186 : vector<8x64xf32>
    %192 = arith.addf %191, %188 : vector<8x64xf32>
    %193 = arith.addf %192, %190 : vector<8x64xf32>
    %194 = math.log %193 : vector<8x64xf32>
    %195 = arith.subf %20, %62 : vector<8x64xf32>
    %196 = arith.mulf %184, %195 : vector<8x64xf32>
    %197 = arith.subf %22, %96 : vector<8x64xf32>
    %198 = arith.mulf %186, %197 : vector<8x64xf32>
    %199 = arith.addf %196, %198 : vector<8x64xf32>
    %200 = arith.subf %24, %130 : vector<8x64xf32>
    %201 = arith.mulf %188, %200 : vector<8x64xf32>
    %202 = arith.addf %199, %201 : vector<8x64xf32>
    %203 = arith.subf %26, %164 : vector<8x64xf32>
    %204 = arith.mulf %190, %203 : vector<8x64xf32>
    %205 = arith.addf %202, %204 : vector<8x64xf32>
    %206 = arith.divf %205, %193 : vector<8x64xf32>
    %207 = arith.subf %167, %182 : vector<8x64xf32>
    %208 = arith.addf %206, %207 : vector<8x64xf32>
    %209 = arith.subf %179, %194 : vector<8x64xf32>
    %210 = arith.addf %208, %209 : vector<8x64xf32>
    %211 = arith.mulf %210, %28 : vector<8x64xf32>
    %c0_113 = arith.constant 0 : index
    %c0_114 = arith.constant 0 : index
    %212 = vector.load %arg9[%c0_113, %c0_114] : memref<8x64xf32, #tpu.memory_space<vmem>>, vector<8x64xf32>
    %213 = arith.addf %212, %211 : vector<8x64xf32>
    %c0_115 = arith.constant 0 : index
    %c0_116 = arith.constant 0 : index
    %214 = vector.load %arg9[%c0_115, %c0_116] : memref<8x64xf32, #tpu.memory_space<vmem>>, vector<8x64xf32>
    tpu.vector_store %arg9[%c0_115, %c0_116], %213 {strides = array<i32>} : memref<8x64xf32, #tpu.memory_space<vmem>>, vector<8x64xf32>,
    %c0_i32_117 = arith.constant 0 : i32
    %215 = arith.cmpi eq, %arg2, %c0_i32_117 : i32
    %216 = arith.extui %215 : i1 to i32
    %c0_i32_118 = arith.constant 0 : i32
    %217 = arith.cmpi ne, %216, %c0_i32_118 : i32
    scf.if %217 {
      %c0_119 = arith.constant 0 : index
      %c0_120 = arith.constant 0 : index
      %218 = vector.load %arg9[%c0_119, %c0_120] : memref<8x64xf32, #tpu.memory_space<vmem>>, vector<8x64xf32>
      %219 = vector.shape_cast %218 : vector<8x64xf32> to vector<1x8x64xf32>
      %cst = arith.constant dense<0.000000e+00> : vector<1xf32>
      %220 = vector.multi_reduction <add>, %219, %cst [1, 2] : vector<1x8x64xf32> to vector<1xf32>
      %221 = vector.shape_cast %220 : vector<1xf32> to vector<1x1x1xf32>
      %222 = vector.extract %221[0, 0, 0] : f32 from vector<1x1x1xf32>
      %223 = vector.broadcast %222 : f32 to vector<1x1x8x128xf32>
      %c0_121 = arith.constant 0 : index
      %c0_122 = arith.constant 0 : index
      %c0_123 = arith.constant 0 : index
      %c0_124 = arith.constant 0 : index
      %224 = vector.load %arg8[%c0_121, %c0_122, %c0_123, %c0_124] : memref<1x1x8x128xf32, #tpu.memory_space<vmem>>, vector<1x1x8x128xf32>
      tpu.vector_store %arg8[%c0_121, %c0_122, %c0_123, %c0_124], %223 {strides = array<i32>} : memref<1x1x8x128xf32, #tpu.memory_space<vmem>>, vector<1x1x8x128xf32>,
    } else {
    }
    return
  }
  func.func @transform_0(%arg0: i32, %arg1: i32, %arg2: i32) -> (i32, i32) {
    %c0_i32 = arith.constant 0 : i32
    %c0_i32_0 = arith.constant 0 : i32
    %c0_i32_1 = arith.constant 0 : i32
    return %c0_i32, %c0_i32_0 : i32, i32
  }
  func.func @transform_1(%arg0: i32, %arg1: i32, %arg2: i32) -> i32 {
    %c0_i32 = arith.constant 0 : i32
    %c0_i32_0 = arith.constant 0 : i32
    return %c0_i32 : i32
  }
  func.func @transform_2(%arg0: i32, %arg1: i32, %arg2: i32) -> (i32, i32, i32, i32) {
    %c1_i32 = arith.constant 1 : i32
    %0 = arith.muli %arg1, %c1_i32 : i32
    %1 = arith.addi %0, %arg2 : i32
    %c0_i32 = arith.constant 0 : i32
    %2 = arith.minsi %1, %c0_i32 : i32
    %c0_i32_0 = arith.constant 0 : i32
    %c0_i32_1 = arith.constant 0 : i32
    %c0_i32_2 = arith.constant 0 : i32
    return %arg0, %c0_i32_0, %c0_i32_1, %2 : i32, i32, i32, i32
  }
  func.func @transform_3(%arg0: i32, %arg1: i32, %arg2: i32) -> (i32, i32, i32, i32) {
    %c1_i32 = arith.constant 1 : i32
    %0 = arith.muli %arg1, %c1_i32 : i32
    %1 = arith.addi %0, %arg2 : i32
    %c0_i32 = arith.constant 0 : i32
    %2 = arith.minsi %1, %c0_i32 : i32
    %c0_i32_0 = arith.constant 0 : i32
    %c0_i32_1 = arith.constant 0 : i32
    %c0_i32_2 = arith.constant 0 : i32
    return %arg0, %c0_i32_0, %c0_i32_1, %2 : i32, i32, i32, i32
  }
  func.func @transform_4(%arg0: i32, %arg1: i32, %arg2: i32) -> (i32, i32, i32, i32) {
    %c1_i32 = arith.constant 1 : i32
    %0 = arith.muli %arg1, %c1_i32 : i32
    %1 = arith.addi %0, %arg2 : i32
    %c0_i32 = arith.constant 0 : i32
    %2 = arith.minsi %1, %c0_i32 : i32
    %c0_i32_0 = arith.constant 0 : i32
    %c0_i32_1 = arith.constant 0 : i32
    %c0_i32_2 = arith.constant 0 : i32
    return %arg0, %c0_i32_0, %c0_i32_1, %2 : i32, i32, i32, i32
  }
  func.func @transform_5(%arg0: i32, %arg1: i32, %arg2: i32) -> (i32, i32, i32, i32) {
    %c0_i32 = arith.constant 0 : i32
    %c0_i32_0 = arith.constant 0 : i32
    %c0_i32_1 = arith.constant 0 : i32
    return %arg0, %arg1, %c0_i32, %c0_i32_0 : i32, i32, i32, i32
  }
}

</mosaic_0001>

<llo_original>
// kernel: dkd_loss8_forward.1
$region0: #{dkd_loss8_forward.1}
  #allocation0 [shape = 'u32[]', space=smem, size = 0x4, offset = 0x4, fixed_abs, tag = 'smem constant byte address 0x4 - core index']
  #allocation1 [shape = 'u32[72,128]{1,0:T(1,128)}', space=vmem, size = 0x9000, scoped, tag = 'internal scratch']
  #allocation2 [shape = 'f32[8,64]{1,0:T(8,128)}', space=vmem, size = 0x1000, scoped, tag = 'scratch operand']
  %s0 = inlined_call_operand.vmem [shape: f32[8,4], index: 0, kind: input, shape index: {}]
  %s1 = inlined_call_operand.vmem [shape: f32[4], index: 1, kind: input, shape index: {}]
  %s2 = inlined_call_operand.vmem [shape: f32[2,8,8,64], index: 2, kind: input, shape index: {}]
  %s3 = inlined_call_operand.vmem [shape: f32[2,4,8,64], index: 3, kind: input, shape index: {}]
  %s4 = inlined_call_operand.vmem [shape: f32[2,1,8,64], index: 4, kind: input, shape index: {}]
  %s5 = inlined_call_operand.vmem [shape: f32[2,1,8,128], index: 5, kind: output, shape index: {}]
  %s6 = sld [smem:[#allocation0]]
  $region69: #{dkd_loss8_forward.1} parent=0
    _
  %s8 = ssub.s32 1, %s6
  %s9 = scalar_select 0, %s8, %s6
  $region1: #{dkd_loss8_forward.1} parent=0
    #allocation3 [shape = 'u8[4096]{0}', space=smem, size = 0x1000, scoped, tag = 'input window, operand 0, single buffered']
    #allocation4 [shape = 's32[2]{0}', space=sflag, size = 0x8, scoped, tag = 'scoped memory for dkd_loss8_forward.1']
    #allocation5 [shape = 'u8[512]{0}', space=smem, size = 0x200, scoped, tag = 'input window, operand 1, single buffered']
    #allocation6 [shape = 's32[1]{0}', space=sflag, size = 0x4, scoped, tag = 'scoped memory for dkd_loss8_forward.1']
    %10 = vsyncpa [#allocation4], 0
    %11 = vsyncpa [#allocation6], 0
    loop: start=0, step=1, limit=4
    $region2: #{dkd_loss8_forward.1} parent=1 // loop_pre_header
      _
    $region3: #{dkd_loss8_forward.1} parent=1 // loop_header
      %s13 = sphi 0, %s17
      %p14 = scmp.ge.s32.totalorder %s13, 4
      %s20 = sphi 0, %s39
      %s21 = sphi 0, %s35
      %s22 = sphi 0, %s31
      %s23 = sphi 0, %s20
      %s24 = sphi 0, %s21
      %s25 = sphi 0, %s22
      %s26 = sphi 0, %s23
      %s27 = sphi 0, %s24
      %s28 = sphi 0, %s25
      %s40 = sphi 0, %s40
      %s42 = sphi 0, %s40
      %s43 = sphi 0, %s42
      %s57 = sphi 0, %s43
      %s61 = sphi 0, %s61
      %s63 = sphi 0, %s61
      %s64 = sphi 0, %s63
      %s78 = sphi 0, %s64
      %s92 = sphi 0, %s94
      %s95 = sphi 0, %s92
      %s96 = sphi 0, %s95
      %s112 = sphi 0, %s96
      %s126 = sphi 0, %s128
      %s129 = sphi 0, %s126
      %s130 = sphi 0, %s129
      %s146 = sphi 0, %s130
      %s160 = sphi 0, %s162
      %s163 = sphi 0, %s160
      %s164 = sphi 0, %s163
      %s180 = sphi 0, %s164
      %s188 = sphi 0, %s190
      %s191 = sphi 0, %s188
      %s192 = sphi 0, %s191
      %s208 = sphi 0, %s192
    $region4: #{dkd_loss8_forward.1} parent=1 // loop_header_branch
      %16 = sbr.rel (%p14) target = $region8
    $region5: #{dkd_loss8_forward.1} parent=1 // loop_body
      %s18 = ssub.s32 %s13, 1
      %s19 = ssub.s32 %s13, 2
      %s29 = sadd.s32 1, %s22
      %p30 = scmp.ge.s32.totalorder %s29, 1
      %s31 = scalar_select %p30, 0, %s29
      %s32 = sadd.s32 1, %s21
      %s33 = scalar_select %p30, %s32, %s21
      %p34 = scmp.ge.s32.totalorder %s33, 1
      %s35 = scalar_select %p34, 0, %s33
      %s36 = sadd.s32 1, %s20
      %s37 = scalar_select %p34, %s36, %s20
      %p38 = scmp.ge.s32.totalorder %s37, 2
      %s39 = scalar_select %p38, 0, %s37
      %s41 = sadd.s32 %s40, 1
      %p44 = scmp.eq.s32.totalorder %s13, 1
      %p45 = scmp.ne.s32.totalorder %s40, %s42
      %p46 = scmp.eq.s32.totalorder %s13, 0
      %p47 = por %p45, %p46
      %p48 = scmp.ne.s32.totalorder %s40, %s42
      %p49 = scmp.eq.s32.totalorder %s18, 1
      %p50 = por %p48, %p49
      %p51 = scmp.ne.s32.totalorder %s42, %s43
      %p52 = scmp.eq.s32.totalorder %s18, 0
      %p53 = por %p51, %p52
      %p54 = scmp.ne.s32.totalorder %s42, %s43
      %p55 = scmp.eq.s32.totalorder %s19, 1
      %p56 = por %p54, %p55
      %p58 = scmp.ne.s32.totalorder %s43, %s57
      %p59 = scmp.eq.s32.totalorder %s19, 0
      %p60 = por %p58, %p59
      %s62 = sadd.s32 %s61, 1
      %p65 = scmp.eq.s32.totalorder %s13, 1
      %p66 = scmp.ne.s32.totalorder %s61, %s63
      %p67 = scmp.eq.s32.totalorder %s13, 0
      %p68 = por %p66, %p67
      %p69 = scmp.ne.s32.totalorder %s61, %s63
      %p70 = scmp.eq.s32.totalorder %s18, 1
      %p71 = por %p69, %p70
      %p72 = scmp.ne.s32.totalorder %s63, %s64
      %p73 = scmp.eq.s32.totalorder %s18, 0
      %p74 = por %p72, %p73
      %p75 = scmp.ne.s32.totalorder %s63, %s64
      %p76 = scmp.eq.s32.totalorder %s19, 1
      %p77 = por %p75, %p76
      %p79 = scmp.ne.s32.totalorder %s64, %s78
      %p80 = scmp.eq.s32.totalorder %s19, 0
      %p81 = por %p79, %p80
      %s82 = sadd.s32 %s21, %s22
      %p83 = scmp.lt.s32.totalorder %s82, 0
      %s84 = scalar_select %p83, %s82, 0
      %s85 = sadd.s32 %s35, %s31
      %p86 = scmp.lt.s32.totalorder %s85, 0
      %s87 = scalar_select %p86, %s85, 0
      %s88 = ssub.s32 %s20, %s39
      %s89 = ssub.s32 %s84, %s87
      %s90 = sor.u32 %s88, %s89
      %p91 = scmp.eq.s32.totalorder %s90, 0
      %s93 = sadd.s32 %s92, 1
      %s94 = scalar_select %p91, %s92, %s93
      %p97 = pneg %p91
      %p98 = scmp.eq.s32.totalorder %s13, 1
      %p99 = por %p97, %p98
      %p100 = scmp.ne.s32.totalorder %s92, %s95
      %p101 = scmp.eq.s32.totalorder %s13, 0
      %p102 = por %p100, %p101
      %p103 = scmp.ne.s32.totalorder %s92, %s95
      %p104 = scmp.eq.s32.totalorder %s18, 1
      %p105 = por %p103, %p104
      %p106 = scmp.ne.s32.totalorder %s95, %s96
      %p107 = scmp.eq.s32.totalorder %s18, 0
      %p108 = por %p106, %p107
      %p109 = scmp.ne.s32.totalorder %s95, %s96
      %p110 = scmp.eq.s32.totalorder %s19, 1
      %p111 = por %p109, %p110
      %p113 = scmp.ne.s32.totalorder %s96, %s112
      %p114 = scmp.eq.s32.totalorder %s19, 0
      %p115 = por %p113, %p114
      %s116 = sadd.s32 %s21, %s22
      %p117 = scmp.lt.s32.totalorder %s116, 0
      %s118 = scalar_select %p117, %s116, 0
      %s119 = sadd.s32 %s35, %s31
      %p120 = scmp.lt.s32.totalorder %s119, 0
      %s121 = scalar_select %p120, %s119, 0
      %s122 = ssub.s32 %s20, %s39
      %s123 = ssub.s32 %s118, %s121
      %s124 = sor.u32 %s122, %s123
      %p125 = scmp.eq.s32.totalorder %s124, 0
      %s127 = sadd.s32 %s126, 1
      %s128 = scalar_select %p125, %s126, %s127
      %p131 = pneg %p125
      %p132 = scmp.eq.s32.totalorder %s13, 1
      %p133 = por %p131, %p132
      %p134 = scmp.ne.s32.totalorder %s126, %s129
      %p135 = scmp.eq.s32.totalorder %s13, 0
      %p136 = por %p134, %p135
      %p137 = scmp.ne.s32.totalorder %s126, %s129
      %p138 = scmp.eq.s32.totalorder %s18, 1
      %p139 = por %p137, %p138
      %p140 = scmp.ne.s32.totalorder %s129, %s130
      %p141 = scmp.eq.s32.totalorder %s18, 0
      %p142 = por %p140, %p141
      %p143 = scmp.ne.s32.totalorder %s129, %s130
      %p144 = scmp.eq.s32.totalorder %s19, 1
      %p145 = por %p143, %p144
      %p147 = scmp.ne.s32.totalorder %s130, %s146
      %p148 = scmp.eq.s32.totalorder %s19, 0
      %p149 = por %p147, %p148
      %s150 = sadd.s32 %s21, %s22
      %p151 = scmp.lt.s32.totalorder %s150, 0
      %s152 = scalar_select %p151, %s150, 0
      %s153 = sadd.s32 %s35, %s31
      %p154 = scmp.lt.s32.totalorder %s153, 0
      %s155 = scalar_select %p154, %s153, 0
      %s156 = ssub.s32 %s20, %s39
      %s157 = ssub.s32 %s152, %s155
      %s158 = sor.u32 %s156, %s157
      %p159 = scmp.eq.s32.totalorder %s158, 0
      %s161 = sadd.s32 %s160, 1
      %s162 = scalar_select %p159, %s160, %s161
      %p165 = pneg %p159
      %p166 = scmp.eq.s32.totalorder %s13, 1
      %p167 = por %p165, %p166
      %p168 = scmp.ne.s32.totalorder %s160, %s163
      %p169 = scmp.eq.s32.totalorder %s13, 0
      %p170 = por %p168, %p169
      %p171 = scmp.ne.s32.totalorder %s160, %s163
      %p172 = scmp.eq.s32.totalorder %s18, 1
      %p173 = por %p171, %p172
      %p174 = scmp.ne.s32.totalorder %s163, %s164
      %p175 = scmp.eq.s32.totalorder %s18, 0
      %p176 = por %p174, %p175
      %p177 = scmp.ne.s32.totalorder %s163, %s164
      %p178 = scmp.eq.s32.totalorder %s19, 1
      %p179 = por %p177, %p178
      %p181 = scmp.ne.s32.totalorder %s164, %s180
      %p182 = scmp.eq.s32.totalorder %s19, 0
      %p183 = por %p181, %p182
      %s184 = ssub.s32 %s20, %s39
      %s185 = ssub.s32 %s21, %s35
      %s186 = sor.u32 %s184, %s185
      %p187 = scmp.eq.s32.totalorder %s186, 0
      %s189 = sadd.s32 %s188, 1
      %s190 = scalar_select %p187, %s188, %s189
      %p193 = pneg %p187
      %p194 = scmp.eq.s32.totalorder %s13, 1
      %p195 = por %p193, %p194
      %p196 = scmp.ne.s32.totalorder %s188, %s191
      %p197 = scmp.eq.s32.totalorder %s13, 0
      %p198 = por %p196, %p197
      %p199 = scmp.ne.s32.totalorder %s188, %s191
      %p200 = scmp.eq.s32.totalorder %s18, 1
      %p201 = por %p199, %p200
      %p202 = scmp.ne.s32.totalorder %s191, %s192
      %p203 = scmp.eq.s32.totalorder %s18, 0
      %p204 = por %p202, %p203
      %p205 = scmp.ne.s32.totalorder %s191, %s192
      %p206 = scmp.eq.s32.totalorder %s19, 1
      %p207 = por %p205, %p206
      %p209 = scmp.ne.s32.totalorder %s192, %s208
      %p210 = scmp.eq.s32.totalorder %s19, 0
      %p211 = por %p209, %p210
      %p212 = scmp.le.s32.totalorder 1, %s13
      %p213 = scmp.lt.s32.totalorder %s13, 3
      %p214 = pnand %p212, %p213
      %p215 = pneg %p214
      // Predicated region
      $region9: #{dkd_loss8_forward.1} parent=5 // pred_check
        _
      $region10: #{dkd_loss8_forward.1} parent=5 // pred_check_branch
        %217 = sbr.rel (%p214) target = $region12
      $region11: #{dkd_loss8_forward.1} parent=5 // pred_region
        %s218 = ssub.s32 %s13, 1
        // Predicated region
        $region13: #{dkd_loss8_forward.1} parent=11 // pred_check
          %p219 = pneg %p53
        $region14: #{dkd_loss8_forward.1} parent=11 // pred_check_branch
          %221 = sbr.rel (%p219) target = $region16
        $region15: #{dkd_loss8_forward.1} parent=11 // pred_region
          %223 = vsyncadd [#allocation4], 0
          %s225 = sshll.u32 %s0, 4
          %s226 = int_to_ptr.vmem [resolvable:$true] %s225
          %228 = dma.vmem_to_smem %s226, 128, [#allocation3], [#allocation4]
        $region16: #{dkd_loss8_forward.1} parent=11 // pred_fallthru
          _
        // Predicated region
        $region17: #{dkd_loss8_forward.1} parent=11 // pred_check
          %p229 = pneg %p74
        $region18: #{dkd_loss8_forward.1} parent=11 // pred_check_branch
          %231 = sbr.rel (%p229) target = $region20
        $region19: #{dkd_loss8_forward.1} parent=11 // pred_region
          %233 = vsyncadd [#allocation6], 0
          %s235 = sshll.u32 %s1, 4
          %s236 = int_to_ptr.vmem [resolvable:$true] %s235
          %238 = dma.vmem_to_smem %s236, 16, [#allocation5], [#allocation6]
        $region20: #{dkd_loss8_forward.1} parent=11 // pred_fallthru
          _
      $region12: #{dkd_loss8_forward.1} parent=5 // pred_fallthru
        _
      %p239 = scmp.lt.s32.totalorder %s13, 2
      // Predicated region
      $region21: #{dkd_loss8_forward.1} parent=5 // pred_check
        %p240 = pneg %p239
      $region22: #{dkd_loss8_forward.1} parent=5 // pred_check_branch
        %242 = sbr.rel (%p240) target = $region24
      $region23: #{dkd_loss8_forward.1} parent=5 // pred_region
        // Predicated region
        $region25: #{dkd_loss8_forward.1} parent=23 // pred_check
          %p243 = pneg %p102
        $region26: #{dkd_loss8_forward.1} parent=23 // pred_check_branch
          %245 = sbr.rel (%p243) target = $region28
        $region27: #{dkd_loss8_forward.1} parent=23 // pred_region
          %s246 = sadd.s32 %s21, %s22
          %p247 = scmp.lt.s32.totalorder %s246, 0
          %s248 = scalar_select %p247, %s246, 0
          %p249 = scmp.lt.s32.totalorder %s20, 1
          %s250 = scalar_select %p249, %s20, 1
          %p251 = scmp.lt.s32.totalorder %s248, 0
          %s252 = scalar_select %p251, %s248, 0
          %s253 = smul.addr %s250, 8
          %s254 = sadd.s32 %s252, %s253
          %s255 = smul.addr %s254, 8
          %s256 = scalar_lea.vmem %s2, %s255
          %s257 = sadd.s32 %s21, %s22
          %p258 = scmp.lt.s32.totalorder %s257, 0
          %s259 = scalar_select %p258, %s257, 0
        $region28: #{dkd_loss8_forward.1} parent=23 // pred_fallthru
          _
        // Predicated region
        $region29: #{dkd_loss8_forward.1} parent=23 // pred_check
          %p260 = pneg %p136
        $region30: #{dkd_loss8_forward.1} parent=23 // pred_check_branch
          %262 = sbr.rel (%p260) target = $region32
        $region31: #{dkd_loss8_forward.1} parent=23 // pred_region
          %s263 = sadd.s32 %s21, %s22
          %p264 = scmp.lt.s32.totalorder %s263, 0
          %s265 = scalar_select %p264, %s263, 0
          %p266 = scmp.lt.s32.totalorder %s20, 1
          %s267 = scalar_select %p266, %s20, 1
          %p268 = scmp.lt.s32.totalorder %s265, 0
          %s269 = scalar_select %p268, %s265, 0
          %s270 = smul.addr %s267, 4
          %s271 = sadd.s32 %s269, %s270
          %s272 = smul.addr %s271, 8
          %s273 = scalar_lea.vmem %s3, %s272
          %s274 = sadd.s32 %s21, %s22
          %p275 = scmp.lt.s32.totalorder %s274, 0
          %s276 = scalar_select %p275, %s274, 0
        $region32: #{dkd_loss8_forward.1} parent=23 // pred_fallthru
          _
        // Predicated region
        $region33: #{dkd_loss8_forward.1} parent=23 // pred_check
          %p277 = pneg %p170
        $region34: #{dkd_loss8_forward.1} parent=23 // pred_check_branch
          %279 = sbr.rel (%p277) target = $region36
        $region35: #{dkd_loss8_forward.1} parent=23 // pred_region
          %s280 = sadd.s32 %s21, %s22
          %p281 = scmp.lt.s32.totalorder %s280, 0
          %s282 = scalar_select %p281, %s280, 0
          %p283 = scmp.lt.s32.totalorder %s20, 1
          %s284 = scalar_select %p283, %s20, 1
          %p285 = scmp.lt.s32.totalorder %s282, 0
          %s286 = scalar_select %p285, %s282, 0
          %s287 = sadd.s32 %s286, %s284
          %s288 = smul.addr %s287, 8
          %s289 = scalar_lea.vmem %s4, %s288
          %s290 = sadd.s32 %s21, %s22
          %p291 = scmp.lt.s32.totalorder %s290, 0
          %s292 = scalar_select %p291, %s290, 0
        $region36: #{dkd_loss8_forward.1} parent=23 // pred_fallthru
          _
      $region24: #{dkd_loss8_forward.1} parent=5 // pred_fallthru
        _
      %p293 = scmp.le.s32.totalorder 1, %s13
      %p294 = scmp.lt.s32.totalorder %s13, 3
      %p295 = pnand %p293, %p294
      %p296 = pneg %p295
      // Predicated region
      $region37: #{dkd_loss8_forward.1} parent=5 // pred_check
        _
      $region38: #{dkd_loss8_forward.1} parent=5 // pred_check_branch
        %298 = sbr.rel (%p295) target = $region40
      $region39: #{dkd_loss8_forward.1} parent=5 // pred_region
        %s299 = ssub.s32 %s13, 1
        // Predicated region
        $region41: #{dkd_loss8_forward.1} parent=39 // pred_check
          %p300 = pneg %p53
        $region42: #{dkd_loss8_forward.1} parent=39 // pred_check_branch
          %302 = sbr.rel (%p300) target = $region44
        $region43: #{dkd_loss8_forward.1} parent=39 // pred_region
          %304 = dma.done [#allocation4], 128
        $region44: #{dkd_loss8_forward.1} parent=39 // pred_fallthru
          _
        // Predicated region
        $region45: #{dkd_loss8_forward.1} parent=39 // pred_check
          %p305 = pneg %p74
        $region46: #{dkd_loss8_forward.1} parent=39 // pred_check_branch
          %307 = sbr.rel (%p305) target = $region48
        $region47: #{dkd_loss8_forward.1} parent=39 // pred_region
          %309 = dma.done [#allocation6], 16
        $region48: #{dkd_loss8_forward.1} parent=39 // pred_fallthru
          _
        %310 = sfence
        %p311 = pneg %p53
        %p312 = pneg %p50
        %p313 = pneg %p74
        %p314 = pneg %p71
        %s315 = sadd.s32 %s24, %s25
        %p316 = scmp.lt.s32.totalorder %s315, 0
        %s317 = scalar_select %p316, %s315, 0
        %p318 = scmp.lt.s32.totalorder %s23, 1
        %s319 = scalar_select %p318, %s23, 1
        %p320 = scmp.lt.s32.totalorder %s317, 0
        %s321 = scalar_select %p320, %s317, 0
        %s322 = smul.addr %s319, 8
        %s323 = sadd.s32 %s321, %s322
        %s324 = smul.addr %s323, 8
        %s325 = scalar_lea.vmem %s2, %s324
        %p326 = pneg %p108
        %p327 = pneg %p105
        %s328 = sadd.s32 %s24, %s25
        %p329 = scmp.lt.s32.totalorder %s328, 0
        %s330 = scalar_select %p329, %s328, 0
        %p331 = scmp.lt.s32.totalorder %s23, 1
        %s332 = scalar_select %p331, %s23, 1
        %p333 = scmp.lt.s32.totalorder %s330, 0
        %s334 = scalar_select %p333, %s330, 0
        %s335 = smul.addr %s332, 4
        %s336 = sadd.s32 %s334, %s335
        %s337 = smul.addr %s336, 8
        %s338 = scalar_lea.vmem %s3, %s337
        %p339 = pneg %p142
        %p340 = pneg %p139
        %s341 = sadd.s32 %s24, %s25
        %p342 = scmp.lt.s32.totalorder %s341, 0
        %s343 = scalar_select %p342, %s341, 0
        %p344 = scmp.lt.s32.totalorder %s23, 1
        %s345 = scalar_select %p344, %s23, 1
        %p346 = scmp.lt.s32.totalorder %s343, 0
        %s347 = scalar_select %p346, %s343, 0
        %s348 = sadd.s32 %s347, %s345
        %s349 = smul.addr %s348, 8
        %s350 = scalar_lea.vmem %s4, %s349
        %p351 = pneg %p176
        %p352 = pneg %p173
        %p353 = pneg %p204
        %p354 = pneg %p201
        %p355 = scmp.lt.s32.totalorder %s23, 1
        %s356 = scalar_select %p355, %s23, 1
        %p357 = scmp.lt.s32.totalorder %s24, 0
        %s358 = scalar_select %p357, %s24, 0
        %s359 = sadd.s32 %s358, %s356
        %s360 = smul.addr %s359, 8
        %s361 = scalar_lea.vmem %s5, %s360
        %s362 = sadd.s32 %s24, %s25
        %p363 = scmp.lt.s32.totalorder %s362, 0
        %s364 = scalar_select %p363, %s362, 0
        %p365 = scmp.lt.s32.totalorder %s23, 1
        %s366 = scalar_select %p365, %s23, 1
        %p367 = scmp.lt.s32.totalorder %s364, 0
        %s368 = scalar_select %p367, %s364, 0
        %s369 = smul.addr %s366, 8
        %s370 = sadd.s32 %s368, %s369
        %s371 = smul.addr %s370, 8
        %s372 = scalar_lea.vmem %s2, %s371
        %s373 = sadd.s32 %s24, %s25
        %p374 = scmp.lt.s32.totalorder %s373, 0
        %s375 = scalar_select %p374, %s373, 0
        %s376 = sadd.s32 %s24, %s25
        %p377 = scmp.lt.s32.totalorder %s376, 0
        %s378 = scalar_select %p377, %s376, 0
        %p379 = scmp.lt.s32.totalorder %s23, 1
        %s380 = scalar_select %p379, %s23, 1
        %p381 = scmp.lt.s32.totalorder %s378, 0
        %s382 = scalar_select %p381, %s378, 0
        %s383 = smul.addr %s380, 4
        %s384 = sadd.s32 %s382, %s383
        %s385 = smul.addr %s384, 8
        %s386 = scalar_lea.vmem %s3, %s385
        %s387 = sadd.s32 %s24, %s25
        %p388 = scmp.lt.s32.totalorder %s387, 0
        %s389 = scalar_select %p388, %s387, 0
        %s390 = sadd.s32 %s24, %s25
        %p391 = scmp.lt.s32.totalorder %s390, 0
        %s392 = scalar_select %p391, %s390, 0
        %p393 = scmp.lt.s32.totalorder %s23, 1
        %s394 = scalar_select %p393, %s23, 1
        %p395 = scmp.lt.s32.totalorder %s392, 0
        %s396 = scalar_select %p395, %s392, 0
        %s397 = sadd.s32 %s396, %s394
        %s398 = smul.addr %s397, 8
        %s399 = scalar_lea.vmem %s4, %s398
        %s400 = sadd.s32 %s24, %s25
        %p401 = scmp.lt.s32.totalorder %s400, 0
        %s402 = scalar_select %p401, %s400, 0
        %p403 = scmp.lt.s32.totalorder %s23, 1
        %s404 = scalar_select %p403, %s23, 1
        %p405 = scmp.lt.s32.totalorder %s24, 0
        %s406 = scalar_select %p405, %s24, 0
        %s407 = sadd.s32 %s406, %s404
        %s408 = smul.addr %s407, 8
        %s409 = scalar_lea.vmem %s5, %s408
        %p410 = scmp.eq.s32.totalorder %s25, 0
        // Predicated region
        $region49: #{dkd_loss8_forward.1} parent=39 // pred_check
          %p411 = pneg %p410
        $region50: #{dkd_loss8_forward.1} parent=39 // pred_check_branch
          %413 = sbr.rel (%p411) target = $region52
        $region51: #{dkd_loss8_forward.1} parent=39 // pred_region
          %vm414 = vcmask 523264
          %415 = vst.msk [vmem:[#allocation2] sm:$0xff] %vm414, 0.0
        $region52: #{dkd_loss8_forward.1} parent=39 // pred_fallthru
          _
        %v416 = vld [vmem:[%s372] sm:$0xff]
        %s417 = scalar_lea.vmem %s372, 8
        %v418 = vld [vmem:[%s417] sm:$0xff]
        %s419 = scalar_lea.vmem %s372, 16
        %v420 = vld [vmem:[%s419] sm:$0xff]
        %s421 = scalar_lea.vmem %s372, 24
        %v422 = vld [vmem:[%s421] sm:$0xff]
        %s423 = scalar_lea.vmem %s372, 32
        %v424 = vld [vmem:[%s423] sm:$0xff]
        %s425 = scalar_lea.vmem %s372, 40
        %v426 = vld [vmem:[%s425] sm:$0xff]
        %s427 = scalar_lea.vmem %s372, 48
        %v428 = vld [vmem:[%s427] sm:$0xff]
        %s429 = scalar_lea.vmem %s372, 56
        %v430 = vld [vmem:[%s429] sm:$0xff]
        %v431 = vld [vmem:[%s386] sm:$0xff]
        %s432 = scalar_lea.vmem %s386, 8
        %v433 = vld [vmem:[%s432] sm:$0xff]
        %s434 = scalar_lea.vmem %s386, 16
        %v435 = vld [vmem:[%s434] sm:$0xff]
        %s436 = scalar_lea.vmem %s386, 24
        %v437 = vld [vmem:[%s436] sm:$0xff]
        %v438 = vld [vmem:[%s399] sm:$0xff]
        %s439 = sld [smem:[#allocation3]]
        %v440 = vstv %s439
        %v441 = vmul.f32 %v416, %v440
        %s442 = sld [smem:[#allocation3 + $0x80]]
        %v443 = vstv %s442
        %v444 = vmul.f32 %v418, %v443
        %v445 = vadd.f32 %v441, %v444
        %s446 = sld [smem:[#allocation3 + $0x100]]
        %v447 = vstv %s446
        %v448 = vmul.f32 %v420, %v447
        %v449 = vadd.f32 %v445, %v448
        %s450 = sld [smem:[#allocation3 + $0x180]]
        %v451 = vstv %s450
        %v452 = vmul.f32 %v422, %v451
        %v453 = vadd.f32 %v449, %v452
        %s454 = sld [smem:[#allocation3 + $0x200]]
        %v455 = vstv %s454
        %v456 = vmul.f32 %v424, %v455
        %v457 = vadd.f32 %v453, %v456
        %s458 = sld [smem:[#allocation3 + $0x280]]
        %v459 = vstv %s458
        %v460 = vmul.f32 %v426, %v459
        %v461 = vadd.f32 %v457, %v460
        %s462 = sld [smem:[#allocation3 + $0x300]]
        %v463 = vstv %s462
        %v464 = vmul.f32 %v428, %v463
        %v465 = vadd.f32 %v461, %v464
        %s466 = sld [smem:[#allocation3 + $0x380]]
        %v467 = vstv %s466
        %v468 = vmul.f32 %v430, %v467
        %v469 = vadd.f32 %v465, %v468
        %s470 = sld [smem:[#allocation5]]
        %v471 = vstv %s470
        %v472 = vadd.f32 %v469, %v471
        %s473 = sld [smem:[#allocation3 + $0x1]]
        %v474 = vstv %s473
        %v475 = vmul.f32 %v416, %v474
        %s476 = sld [smem:[#allocation3 + $0x81]]
        %v477 = vstv %s476
        %v478 = vmul.f32 %v418, %v477
        %v479 = vadd.f32 %v475, %v478
        %s480 = sld [smem:[#allocation3 + $0x101]]
        %v481 = vstv %s480
        %v482 = vmul.f32 %v420, %v481
        %v483 = vadd.f32 %v479, %v482
        %s484 = sld [smem:[#allocation3 + $0x181]]
        %v485 = vstv %s484
        %v486 = vmul.f32 %v422, %v485
        %v487 = vadd.f32 %v483, %v486
        %s488 = sld [smem:[#allocation3 + $0x201]]
        %v489 = vstv %s488
        %v490 = vmul.f32 %v424, %v489
        %v491 = vadd.f32 %v487, %v490
        %s492 = sld [smem:[#allocation3 + $0x281]]
        %v493 = vstv %s492
        %v494 = vmul.f32 %v426, %v493
        %v495 = vadd.f32 %v491, %v494
        %s496 = sld [smem:[#allocation3 + $0x301]]
        %v497 = vstv %s496
        %v498 = vmul.f32 %v428, %v497
        %v499 = vadd.f32 %v495, %v498
        %s500 = sld [smem:[#allocation3 + $0x381]]
        %v501 = vstv %s500
        %v502 = vmul.f32 %v430, %v501
        %v503 = vadd.f32 %v499, %v502
        %s504 = sld [smem:[#allocation5 + $0x1]]
        %v505 = vstv %s504
        %v506 = vadd.f32 %v503, %v505
        %s507 = sld [smem:[#allocation3 + $0x2]]
        %v508 = vstv %s507
        %v509 = vmul.f32 %v416, %v508
        %s510 = sld [smem:[#allocation3 + $0x82]]
        %v511 = vstv %s510
        %v512 = vmul.f32 %v418, %v511
        %v513 = vadd.f32 %v509, %v512
        %s514 = sld [smem:[#allocation3 + $0x102]]
        %v515 = vstv %s514
        %v516 = vmul.f32 %v420, %v515
        %v517 = vadd.f32 %v513, %v516
        %s518 = sld [smem:[#allocation3 + $0x182]]
        %v519 = vstv %s518
        %v520 = vmul.f32 %v422, %v519
        %v521 = vadd.f32 %v517, %v520
        %s522 = sld [smem:[#allocation3 + $0x202]]
        %v523 = vstv %s522
        %v524 = vmul.f32 %v424, %v523
        %v525 = vadd.f32 %v521, %v524
        %s526 = sld [smem:[#allocation3 + $0x282]]
        %v527 = vstv %s526
        %v528 = vmul.f32 %v426, %v527
        %v529 = vadd.f32 %v525, %v528
        %s530 = sld [smem:[#allocation3 + $0x302]]
        %v531 = vstv %s530
        %v532 = vmul.f32 %v428, %v531
        %v533 = vadd.f32 %v529, %v532
        %s534 = sld [smem:[#allocation3 + $0x382]]
        %v535 = vstv %s534
        %v536 = vmul.f32 %v430, %v535
        %v537 = vadd.f32 %v533, %v536
        %s538 = sld [smem:[#allocation5 + $0x2]]
        %v539 = vstv %s538
        %v540 = vadd.f32 %v537, %v539
        %s541 = sld [smem:[#allocation3 + $0x3]]
        %v542 = vstv %s541
        %v543 = vmul.f32 %v416, %v542
        %s544 = sld [smem:[#allocation3 + $0x83]]
        %v545 = vstv %s544
        %v546 = vmul.f32 %v418, %v545
        %v547 = vadd.f32 %v543, %v546
        %s548 = sld [smem:[#allocation3 + $0x103]]
        %v549 = vstv %s548
        %v550 = vmul.f32 %v420, %v549
        %v551 = vadd.f32 %v547, %v550
        %s552 = sld [smem:[#allocation3 + $0x183]]
        %v553 = vstv %s552
        %v554 = vmul.f32 %v422, %v553
        %v555 = vadd.f32 %v551, %v554
        %s556 = sld [smem:[#allocation3 + $0x203]]
        %v557 = vstv %s556
        %v558 = vmul.f32 %v424, %v557
        %v559 = vadd.f32 %v555, %v558
        %s560 = sld [smem:[#allocation3 + $0x283]]
        %v561 = vstv %s560
        %v562 = vmul.f32 %v426, %v561
        %v563 = vadd.f32 %v559, %v562
        %s564 = sld [smem:[#allocation3 + $0x303]]
        %v565 = vstv %s564
        %v566 = vmul.f32 %v428, %v565
        %v567 = vadd.f32 %v563, %v566
        %s568 = sld [smem:[#allocation3 + $0x383]]
        %v569 = vstv %s568
        %v570 = vmul.f32 %v430, %v569
        %v571 = vadd.f32 %v567, %v570
        %s572 = sld [smem:[#allocation5 + $0x3]]
        %v573 = vstv %s572
        %v574 = vadd.f32 %v571, %v573
        %v575 = vmax.f32 %v472, %v506
        %v576 = vmax.f32 %v575, %v540
        %v577 = vmax.f32 %v576, %v574
        %v578 = vsub.f32 %v472, %v577
        %v579 = vmul.f32 %v578, 1.442695
        %v580 = vpow.pop %v579
        %v581 = vsub.f32 %v506, %v577
        %v582 = vmul.f32 %v581, 1.442695
        %v583 = vpow.pop %v582
        %v584 = vadd.f32 %v580, %v583
        %v585 = vsub.f32 %v540, %v577
        %v586 = vmul.f32 %v585, 1.442695
        %v587 = vpow.pop %v586
        %v588 = vadd.f32 %v584, %v587
        %v589 = vsub.f32 %v574, %v577
        %v590 = vmul.f32 %v589, 1.442695
        %v591 = vpow.pop %v590
        %v592 = vadd.f32 %v588, %v591
        %v593 = vlog2.pop %v592
        %v594 = vmul.f32 %v593, 0.6931472
        %v595 = vmax.f32 %v431, %v433
        %v596 = vmax.f32 %v595, %v435
        %v597 = vmax.f32 %v596, %v437
        %v598 = vsub.f32 %v431, %v597
        %v599 = vmul.f32 %v598, 1.442695
        %v600 = vpow.pop %v599
        %v601 = vsub.f32 %v433, %v597
        %v602 = vmul.f32 %v601, 1.442695
        %v603 = vpow.pop %v602
        %v604 = vsub.f32 %v435, %v597
        %v605 = vmul.f32 %v604, 1.442695
        %v606 = vpow.pop %v605
        %v607 = vsub.f32 %v437, %v597
        %v608 = vmul.f32 %v607, 1.442695
        %v609 = vpow.pop %v608
        %v610 = vadd.f32 %v600, %v603
        %v611 = vadd.f32 %v610, %v606
        %v612 = vadd.f32 %v611, %v609
        %v613 = vlog2.pop %v612
        %v614 = vmul.f32 %v613, 0.6931472
        %v615 = vsub.f32 %v431, %v472
        %v616 = vmul.f32 %v600, %v615
        %v617 = vsub.f32 %v433, %v506
        %v618 = vmul.f32 %v603, %v617
        %v619 = vadd.f32 %v616, %v618
        %v620 = vsub.f32 %v435, %v540
        %v621 = vmul.f32 %v606, %v620
        %v622 = vadd.f32 %v619, %v621
        %v623 = vsub.f32 %v437, %v574
        %v624 = vmul.f32 %v609, %v623
        %v625 = vadd.f32 %v622, %v624
        %v626 = vrcp.pop %v612
        %v627 = vmul.f32 %v612, %v626
        %v628 = vsub.f32 1.0, %v627
        %v629 = vmul.f32 %v626, %v628
        %v630 = vadd.f32 %v626, %v629
        %vm631 = vweird.f32 %v612
        %vm632 = vweird.f32 %v626
        %vm633 = vmor %vm631, %vm632
        %v634 = vsel %vm633, %v626, %v630
        %v635 = vand.u32 2147483647, %v612
        %vm636 = vcmp.eq.f32.partialorder %v635, 8.507059e+37
        %v637 = vand.u32 %v612, 2147483648
        %v638 = vor.u32 1.1754944e-38, %v637
        %v639 = vsel %vm636, %v638, %v634
        %v640 = vmul.f32 %v625, %v639
        %v641 = vsub.f32 %v577, %v597
        %v642 = vadd.f32 %v640, %v641
        %v643 = vsub.f32 %v594, %v614
        %v644 = vadd.f32 %v642, %v643
        %v645 = vmul.f32 %v644, %v438
        %v646 = vld [vmem:[#allocation2] sm:$0xff]
        %v647 = vadd.f32 %v646, %v645
        %vm648 = vcmask 523264
        %649 = vst.msk [vmem:[#allocation2] sm:$0xff] %vm648, %v647
        // Predicated region
        $region53: #{dkd_loss8_forward.1} parent=39 // pred_check
          %p650 = pneg %p410
        $region54: #{dkd_loss8_forward.1} parent=39 // pred_check_branch
          %652 = sbr.rel (%p650) target = $region56
        $region55: #{dkd_loss8_forward.1} parent=39 // pred_region
          %v653 = vld [vmem:[#allocation2] sm:$0xff]
          %v654 = vsel %vm648, %v653, 0.0
          %655 = vadd.xlane.f32.xlu0 %v654
          %v656 = vpop.xlane.xlu0 %655
          %v657 = vrot.slane %v656, 4
          %v658 = vadd.f32 %v656, %v657
          %v659 = vrot.slane %v658, 2
          %v660 = vadd.f32 %v658, %v659
          %v661 = vrot.slane %v660, 1
          %v662 = vadd.f32 %v660, %v661
          %s663 = vtos %v662
          %v664 = vstv %s663
          %665 = vst [vmem:[%s409] sm:$0xff] %v664
        $region56: #{dkd_loss8_forward.1} parent=39 // pred_fallthru
          _
        %p666 = scmp.lt.s32.totalorder %s23, 1
        %s667 = scalar_select %p666, %s23, 1
        %p668 = scmp.lt.s32.totalorder %s24, 0
        %s669 = scalar_select %p668, %s24, 0
        %s670 = sadd.s32 %s669, %s667
        %s671 = smul.addr %s670, 8
        %s672 = scalar_lea.vmem %s5, %s671
        // Predicated region
        $region57: #{dkd_loss8_forward.1} parent=39 // pred_check
          %p673 = pneg %p201
        $region58: #{dkd_loss8_forward.1} parent=39 // pred_check_branch
          %675 = sbr.rel (%p673) target = $region60
        $region59: #{dkd_loss8_forward.1} parent=39 // pred_region
          _
        $region60: #{dkd_loss8_forward.1} parent=39 // pred_fallthru
          _
      $region40: #{dkd_loss8_forward.1} parent=5 // pred_fallthru
        _
      %p676 = scmp.le.s32.totalorder 2, %s13
      // Predicated region
      $region61: #{dkd_loss8_forward.1} parent=5 // pred_check
        %p677 = pneg %p676
      $region62: #{dkd_loss8_forward.1} parent=5 // pred_check_branch
        %679 = sbr.rel (%p677) target = $region64
      $region63: #{dkd_loss8_forward.1} parent=5 // pred_region
        %s680 = ssub.s32 %s13, 2
        // Predicated region
        $region65: #{dkd_loss8_forward.1} parent=63 // pred_check
          %p681 = pneg %p207
        $region66: #{dkd_loss8_forward.1} parent=63 // pred_check_branch
          %683 = sbr.rel (%p681) target = $region68
        $region67: #{dkd_loss8_forward.1} parent=63 // pred_region
          %p684 = scmp.lt.s32.totalorder %s26, 1
          %s685 = scalar_select %p684, %s26, 1
          %p686 = scmp.lt.s32.totalorder %s27, 0
          %s687 = scalar_select %p686, %s27, 0
          %s688 = sadd.s32 %s687, %s685
          %s689 = smul.addr %s688, 8
          %s690 = scalar_lea.vmem %s5, %s689
        $region68: #{dkd_loss8_forward.1} parent=63 // pred_fallthru
          _
      $region64: #{dkd_loss8_forward.1} parent=5 // pred_fallthru
        _
    $region6: #{dkd_loss8_forward.1} parent=1 // loop_footer
      %s17 = sadd.s32 1, %s13
    $region7: #{dkd_loss8_forward.1} parent=1 // loop_footer_branch
      %12 = sbr.rel target = $region3
    $region8: #{dkd_loss8_forward.1} parent=1 // loop_exit
      _
    %691 = vsyncpa [#allocation4], 1
    %s692 = scalar_lea.sflag [#allocation4], 1
    %693 = vsyncpa %s692, 1
    %694 = vsyncpa [#allocation6], 1

</llo_original>
